<compile_context>
chip_gen: v7x
topology: tpu7x:2x2x1
jax: 0.10.0
libtpu: 0.0.40
codegen_flags: <defaults>
</compile_context>

<pallas_src>
import functools
import math

import jax
import jax.numpy as jnp
from jax.experimental import pallas as pl
from jax.experimental.pallas import tpu as pltpu


_NEG_SENTINEL = -1e30  # large finite negative: keeps the max/exp path NaN-free


# ---------------------------------------------------------------------------
# Pallas kernel: fused  split-col0 -> (score - log(density+eps)) -> logsumexp
# ---------------------------------------------------------------------------
def _ml_regression_kernel(scores_ref, density_ref, l_ref, *, eps, log_num_mc):
    # Load native-dtype tiles, upcast in-vreg (VPU op, hidden under HBM slack).
    s = scores_ref[...].astype(jnp.float32)        # (TB, N)
    d = density_ref[...].astype(jnp.float32)       # (TB, N)
    tb, n = s.shape

    col = jax.lax.broadcasted_iota(jnp.int32, (tb, n), dimension=1)
    is_mc = col > 0                                # lanes 1..N-1 are MC samples

    # Ground-truth score (column 0) via a lane reduce (XLU; free slot-wise).
    gt = jnp.sum(jnp.where(col == 0, s, 0.0), axis=-1, keepdims=True)   # (TB,1)

    # Mask column 0 BEFORE the log (density[:,0] = -1 -> log(negative) = NaN).
    d_safe = jnp.where(is_mc, d, 1.0)
    exp_val = jnp.where(is_mc, s - jnp.log(d_safe + eps), _NEG_SENTINEL)

    # Numerically stable logsumexp over the MC (lane) axis.
    m = jnp.max(exp_val, axis=-1, keepdims=True)                        # (TB,1)
    ssum = jnp.sum(jnp.exp(exp_val - m), axis=-1, keepdims=True)        # (TB,1)
    lse = m + jnp.log(ssum)

    l_ref[...] = lse - log_num_mc - gt             # per-row loss term  (TB,1)


# ---------------------------------------------------------------------------
# Wrapper
# ---------------------------------------------------------------------------
def _pick_block_rows(batch, n, itemsize):
    # 2 inputs x 2 pipeline buffers must fit comfortably in scoped VMEM on all
    # generations (v5e default 16 MiB scoped, v7x 64 MiB physical): ~8 MiB budget.
    budget = 8 * 1024 * 1024
    per_row = 2 * 2 * n * itemsize
    tb = max(8, min(1024, budget // max(per_row, 1)))
    tb = (tb // 8) * 8
    rows_padded = ((batch + 7) // 8) * 8
    return max(8, min(tb, rows_padded))


def ml_regression_loss(scores, sample_density, eps=0.0):
    """Pallas implementation of MLRegression.forward with mc_dim=1.

    scores:          (B, 1 + S)  -- index 0 along dim 1 is the ground-truth sample
    sample_density:  (B, 1 + S)  -- sample_density[:, 0] is the (-1) marker, unused
    Returns a scalar loss.
    """
    # TODO(synk): arbitrary trailing MC dims (scores[:, :, ...]) not implemented;
    # pytracking uses the 2-D (num_sequences, num_samples) case handled here.
    assert scores.ndim == 2 and sample_density.shape == scores.shape
    B, N = scores.shape
    S = N - 1
    assert S >= 1

    tb = _pick_block_rows(B, N, jnp.dtype(scores.dtype).itemsize)
    grid = (pl.cdiv(B, tb),)

    per_row = pl.pallas_call(
        functools.partial(
            _ml_regression_kernel,
            eps=float(eps),
            log_num_mc=math.log(S),
        ),
        out_shape=jax.ShapeDtypeStruct((B, 1), jnp.float32),
        grid=grid,
        in_specs=[
            pl.BlockSpec((tb, N), lambda i: (i, 0)),   # full lane extent: no
            pl.BlockSpec((tb, N), lambda i: (i, 0)),   # wrapper slices/copies
        ],
        out_specs=pl.BlockSpec((tb, 1), lambda i: (i, 0)),
        compiler_params=pltpu.CompilerParams(
            dimension_semantics=("parallel",)),
    )(scores, sample_density)

    # Tiny epilogue reduce over exactly B valid rows (padded rows never written).
    return jnp.mean(per_row)


# ---------------------------------------------------------------------------
# Pure-JAX reference (mirrors the PyTorch module exactly)
# ---------------------------------------------------------------------------
def ml_regression_ref(scores, sample_density, eps=0.0):
    exp_val = scores[:, 1:] - jnp.log(sample_density[:, 1:] + eps)
    L = (jax.nn.logsumexp(exp_val, axis=1)
         - math.log(scores.shape[1] - 1)
         - scores[:, 0])
    return jnp.mean(L)


if __name__ == "__main__":
    key = jax.random.PRNGKey(0)
    k1, k2 = jax.random.split(key)

    B = 8            # batch (number of sequences)
    S = 128          # number of MC samples (lane-dense)
    eps = 0.0

    scores = jax.random.normal(k1, (B, S + 1), jnp.float32)
    density_mc = jax.random.uniform(k2, (B, S), jnp.float32,
                                    minval=0.05, maxval=1.0)
    sample_density = jnp.concatenate(
        [jnp.full((B, 1), -1.0, jnp.float32), density_mc], axis=1)

    # Module contract check (the torch assert), done host-side.
    assert bool(jnp.all(sample_density[:, 0] == -1.0))   # mc_dim == 1 convention

    loss_fn = jax.jit(functools.partial(ml_regression_loss, eps=eps))
    loss = jax.block_until_ready(loss_fn(scores, sample_density))

    ref = jax.block_until_ready(ml_regression_ref(scores, sample_density, eps))

    assert loss.shape == (), loss.shape
    assert bool(jnp.isfinite(loss))
    assert abs(float(loss) - float(ref)) < 1e-4, (float(loss), float(ref))
    print("KERNEL_OK")
</pallas_src>

<mosaic_0001>
module attributes {stable_mosaic.version = 11 : i64} {
  func.func @_ml_regression_kernel(%arg0: i32, %arg1: memref<8x129xf32, #tpu.memory_space<vmem>>, %arg2: memref<8x129xf32, #tpu.memory_space<vmem>>, %arg3: memref<8x1xf32, #tpu.memory_space<vmem>>) attributes {dimension_semantics = [#tpu.dimension_semantics<parallel>], iteration_bounds = array<i64: 1>, scalar_prefetch = 0 : i64, scratch_operands = 0 : i64, tpu.core_type = #tpu.core_type<tc>, window_params = [{transform_indices = @transform_0, window_bounds = array<i64: 8, 129>}, {transform_indices = @transform_1, window_bounds = array<i64: 8, 129>}, {transform_indices = @transform_2, window_bounds = array<i64: 8, 1>}]} {
    %c0 = arith.constant 0 : index
    %c0_0 = arith.constant 0 : index
    %0 = vector.load %arg1[%c0, %c0_0] : memref<8x129xf32, #tpu.memory_space<vmem>>, vector<8x129xf32>
    %c0_1 = arith.constant 0 : index
    %c0_2 = arith.constant 0 : index
    %1 = vector.load %arg2[%c0_1, %c0_2] : memref<8x129xf32, #tpu.memory_space<vmem>>, vector<8x129xf32>
    %2 = tpu.iota {dimensions = array<i32: 1>} : vector<8x129xi32>
    %c0_i32 = arith.constant 0 : i32
    %3 = vector.broadcast %c0_i32 : i32 to vector<8x129xi32>
    %4 = arith.cmpi sgt, %2, %3 : vector<8x129xi32>
    %c0_i32_3 = arith.constant 0 : i32
    %5 = vector.broadcast %c0_i32_3 : i32 to vector<8x129xi32>
    %6 = arith.cmpi eq, %2, %5 : vector<8x129xi32>
    %cst = arith.constant 0.000000e+00 : f32
    %7 = vector.broadcast %cst : f32 to vector<8x129xf32>
    %8 = arith.select %6, %0, %7 : vector<8x129xi1>, vector<8x129xf32>
    %cst_4 = arith.constant dense<0.000000e+00> : vector<8xf32>
    %9 = vector.multi_reduction <add>, %8, %cst_4 [1] : vector<8x129xf32> to vector<8xf32>
    %10 = vector.shape_cast %9 : vector<8xf32> to vector<8x1xf32>
    %cst_5 = arith.constant 1.000000e+00 : f32
    %11 = vector.broadcast %cst_5 : f32 to vector<8x129xf32>
    %12 = arith.select %4, %1, %11 : vector<8x129xi1>, vector<8x129xf32>
    %cst_6 = arith.constant 0.000000e+00 : f32
    %13 = vector.broadcast %cst_6 : f32 to vector<8x129xf32>
    %14 = arith.addf %12, %13 : vector<8x129xf32>
    %15 = math.log %14 : vector<8x129xf32>
    %16 = arith.subf %0, %15 : vector<8x129xf32>
    %cst_7 = arith.constant -1.000000e+30 : f32
    %17 = vector.broadcast %cst_7 : f32 to vector<8x129xf32>
    %18 = arith.select %4, %16, %17 : vector<8x129xi1>, vector<8x129xf32>
    %cst_8 = arith.constant dense<0xFF800000> : vector<8xf32>
    %19 = vector.multi_reduction <maximumf>, %18, %cst_8 [1] : vector<8x129xf32> to vector<8xf32>
    %20 = vector.shape_cast %19 : vector<8xf32> to vector<8x1xf32>
    %21 = vector.broadcast %20 : vector<8x1xf32> to vector<8x129xf32>
    %22 = arith.subf %18, %21 : vector<8x129xf32>
    %23 = math.exp %22 : vector<8x129xf32>
    %cst_9 = arith.constant dense<0.000000e+00> : vector<8xf32>
    %24 = vector.multi_reduction <add>, %23, %cst_9 [1] : vector<8x129xf32> to vector<8xf32>
    %25 = vector.shape_cast %24 : vector<8xf32> to vector<8x1xf32>
    %26 = math.log %25 : vector<8x1xf32>
    %27 = arith.addf %20, %26 : vector<8x1xf32>
    %cst_10 = arith.constant 4.85203028 : f32
    %28 = vector.broadcast %cst_10 : f32 to vector<8x1xf32>
    %29 = arith.subf %27, %28 : vector<8x1xf32>
    %30 = arith.subf %29, %10 : vector<8x1xf32>
    %c0_11 = arith.constant 0 : index
    %c0_12 = arith.constant 0 : index
    %31 = vector.load %arg3[%c0_11, %c0_12] : memref<8x1xf32, #tpu.memory_space<vmem>>, vector<8x1xf32>
    tpu.vector_store %arg3[%c0_11, %c0_12], %30 {strides = array<i32>} : memref<8x1xf32, #tpu.memory_space<vmem>>, vector<8x1xf32>,
    return
  }
  func.func @transform_0(%arg0: i32) -> (i32, i32) {
    %c0_i32 = arith.constant 0 : i32
    %c0_i32_0 = arith.constant 0 : i32
    return %arg0, %c0_i32 : i32, i32
  }
  func.func @transform_1(%arg0: i32) -> (i32, i32) {
    %c0_i32 = arith.constant 0 : i32
    %c0_i32_0 = arith.constant 0 : i32
    return %arg0, %c0_i32 : i32, i32
  }
  func.func @transform_2(%arg0: i32) -> (i32, i32) {
    %c0_i32 = arith.constant 0 : i32
    %c0_i32_0 = arith.constant 0 : i32
    return %arg0, %c0_i32 : i32, i32
  }
}

</mosaic_0001>

<llo_original>
// kernel: ml_regression_loss.1
$region0: #{ml_regression_loss.1}
  #allocation0 [shape = 'u32[]', space=smem, size = 0x4, offset = 0x4, fixed_abs, tag = 'smem constant byte address 0x4 - core index']
  #allocation1 [shape = 'u32[144,128]{1,0:T(1,128)}', space=vmem, size = 0x12000, scoped, tag = 'internal scratch']
  %s0 = inlined_call_operand.hbm [shape: f32[8,129], index: 0, kind: input, shape index: {}]
  %s1 = inlined_call_operand.hbm [shape: f32[8,129], index: 1, kind: input, shape index: {}]
  %s2 = inlined_call_operand.vmem [shape: f32[8,1], index: 2, kind: output, shape index: {}]
  %s3 = sld [smem:[#allocation0]]
  $region26: #{ml_regression_loss.1} parent=0
    _
  %s5 = ssub.s32 1, %s3
  %s6 = scalar_select 0, %s5, %s3
  $region1: #{ml_regression_loss.1} parent=0
    #allocation2 [shape = 'u8[8192]{0}', space=vmem, size = 0x2000, scoped, tag = 'input window, operand 0, single buffered']
    #allocation3 [shape = 's32[1]{0}', space=sflag, size = 0x4, scoped, tag = 'scoped memory for ml_regression_loss.1']
    #allocation4 [shape = 'u8[8192]{0}', space=vmem, size = 0x2000, scoped, tag = 'input window, operand 1, single buffered']
    #allocation5 [shape = 's32[1]{0}', space=sflag, size = 0x4, scoped, tag = 'scoped memory for ml_regression_loss.1']
    %7 = vsyncpa [#allocation3], 0
    %8 = vsyncpa [#allocation5], 0
    // Predicated region
    $region2: #{ml_regression_loss.1} parent=1 // pred_check
      _
    $region3: #{ml_regression_loss.1} parent=1 // pred_check_branch
      %10 = sbr.rel (0) target = $region5
    $region4: #{ml_regression_loss.1} parent=1 // pred_region
      %s12 = ssub.s32 256, 256
      %13 = vsyncadd [#allocation3], %s12
      %s15 = sshll.u32 [#allocation2], 4
      %s16 = int_to_ptr.vmem [resolvable:$true] %s15
      %18 = dma.hbm_to_vmem [thread:$0]  %s0, 256, %s16, [#allocation3]
    $region5: #{ml_regression_loss.1} parent=1 // pred_fallthru
      _
    // Predicated region
    $region6: #{ml_regression_loss.1} parent=1 // pred_check
      _
    $region7: #{ml_regression_loss.1} parent=1 // pred_check_branch
      %20 = sbr.rel (0) target = $region9
    $region8: #{ml_regression_loss.1} parent=1 // pred_region
      %s22 = ssub.s32 256, 256
      %23 = vsyncadd [#allocation5], %s22
      %s25 = sshll.u32 [#allocation4], 4
      %s26 = int_to_ptr.vmem [resolvable:$true] %s25
      %28 = dma.hbm_to_vmem [thread:$0]  %s1, 256, %s26, [#allocation5]
    $region9: #{ml_regression_loss.1} parent=1 // pred_fallthru
      _
    // Predicated region
    $region10: #{ml_regression_loss.1} parent=1 // pred_check
      _
    $region11: #{ml_regression_loss.1} parent=1 // pred_check_branch
      %30 = sbr.rel (0) target = $region13
    $region12: #{ml_regression_loss.1} parent=1 // pred_region
      %31 = dma.done [#allocation3], 256
    $region13: #{ml_regression_loss.1} parent=1 // pred_fallthru
      _
    // Predicated region
    $region14: #{ml_regression_loss.1} parent=1 // pred_check
      _
    $region15: #{ml_regression_loss.1} parent=1 // pred_check_branch
      %33 = sbr.rel (0) target = $region17
    $region16: #{ml_regression_loss.1} parent=1 // pred_region
      %34 = dma.done [#allocation5], 256
    $region17: #{ml_regression_loss.1} parent=1 // pred_fallthru
      _
    %v35 = vld [vmem:[#allocation2] sm:$0xff]
    %v36 = vld [vmem:[#allocation2 + $0x8] sm:$0xff]
    %v37 = vld [vmem:[#allocation4] sm:$0xff]
    %v38 = vld [vmem:[#allocation4 + $0x8] sm:$0xff]
    %v39 = vlaneseq
    %v40 = vand.u32 %v39, 127
    %v41 = vadd.s32 %v40, 128
    %vm42 = vcmp.gt.s32.totalorder %v40, 0
    %vm43 = vcmp.gt.s32.totalorder %v41, 0
    %vm44 = vcmp.eq.s32.totalorder %v40, 0
    %vm45 = vcmp.eq.s32.totalorder %v41, 0
    %v46 = vsel %vm44, %v35, 0.0
    %v47 = vsel %vm45, %v36, 0.0
    %vm48 = vcmask 7168
    %v49 = vsel %vm48, %v47, 0.0
    %v50 = vadd.f32 %v46, %v49
    %51 = vadd.xlane.f32.xlu0 %v50
    %v52 = vpop.xlane.xlu0 %51
    %v53 = vsel %vm42, %v37, 1.0
    %v54 = vsel %vm43, %v38, 1.0
    %v55 = vadd.f32 %v53, 0.0
    %v56 = vadd.f32 %v54, 0.0
    %v57 = vlog2.pop %v55
    %v58 = vmul.f32 %v57, 0.6931472
    %v59 = vlog2.pop %v56
    %v60 = vmul.f32 %v59, 0.6931472
    %v61 = vsub.f32 %v35, %v58
    %v62 = vsub.f32 %v36, %v60
    %v63 = vsel %vm42, %v61, -1e+30
    %v64 = vsel %vm43, %v62, -1e+30
    %v65 = vsel %vm48, %v64, -inf
    %v66 = vmax.f32 %v63, %v65
    %67 = vmax.xlane.f32.xlu0 %v66
    %v68 = vpop.xlane.xlu0 %67
    %v69 = vsub.f32 %v63, %v68
    %v70 = vsub.f32 %v64, %v68
    %v71 = vmul.f32 %v69, 1.442695
    %v72 = vpow.pop %v71
    %v73 = vmul.f32 %v70, 1.442695
    %v74 = vpow.pop %v73
    %v75 = vsel %vm48, %v74, 0.0
    %v76 = vadd.f32 %v72, %v75
    %77 = vadd.xlane.f32.xlu0 %v76
    %v78 = vpop.xlane.xlu0 %77
    %v79 = vlog2.pop %v78
    %v80 = vmul.f32 %v79, 0.6931472
    %v81 = vadd.f32 %v68, %v80
    %v82 = vsub.f32 %v81, 4.8520303
    %v83 = vsub.f32 %v82, %v52
    %84 = vst.msk [vmem:[%s2] sm:$0xff] %vm48, %v83
    // Predicated region
    $region18: #{ml_regression_loss.1} parent=1 // pred_check
      _
    $region19: #{ml_regression_loss.1} parent=1 // pred_check_branch
      %86 = sbr.rel (0) target = $region21
    $region20: #{ml_regression_loss.1} parent=1 // pred_region
      _
    $region21: #{ml_regression_loss.1} parent=1 // pred_fallthru
      _
    // Predicated region
    $region22: #{ml_regression_loss.1} parent=1 // pred_check
      _
    $region23: #{ml_regression_loss.1} parent=1 // pred_check_branch
      %88 = sbr.rel (0) target = $region25
    $region24: #{ml_regression_loss.1} parent=1 // pred_region
      _
    $region25: #{ml_regression_loss.1} parent=1 // pred_fallthru
      _
    %89 = vsyncpa [#allocation3], 1
    %90 = vsyncpa [#allocation5], 1

</llo_original>
